<compile_context>
chip_gen: v7x
topology: tpu7x:2x2x1
jax: 0.10.0
libtpu: 0.0.40
codegen_flags: <defaults>
</compile_context>

<pallas_src>
import functools
import math

import jax
import jax.numpy as jnp
from jax.experimental import pallas as pl
from jax.experimental.pallas import tpu as pltpu

# ---- model hyperparameters (small, consistent with the module) ----
DIM = 32          # dim_Q = dim_K = dim_V
NUM_HEADS = 4
NUM_SEEDS = 8
SET_LEN = 16      # N, size of the input set X
BATCH = 2
DIM_SPLIT = DIM // NUM_HEADS


def _pma_kernel(qblk_t_ref, q0_ref, hmask_ref, x_ref,
                wkv_ref, bkv_ref, wo_ref, bo_ref, o_ref, *, compute_dtype):
    bt, n, d = x_ref.shape                 # (B_TILE, SET_LEN, DIM)
    nh, ns = NUM_HEADS, NUM_SEEDS
    m = nh * ns                            # all heads*seeds, lives on lanes

    # ---- fused K/V projection: one tall matmul over the whole batch tile ----
    x_flat = x_ref[...].reshape(bt * n, d)                       # (bt*n, DIM)
    kv = jnp.dot(x_flat.astype(compute_dtype),
                 wkv_ref[...].astype(compute_dtype),
                 preferred_element_type=jnp.float32) + bkv_ref[...]
    k_flat = kv[:, :d]                                           # (bt*n, DIM)
    v3 = kv[:, d:].reshape(bt, n, d)                             # (bt, n, DIM)

    # ---- all-head logits: ONE flat matmul, heads*seeds on the lane axis ----
    # qblk_t[c, h*S+s] = Q0[s, c]/sqrt(DIM) if column c belongs to head h
    # else 0, so column (h*S+s) of k_flat @ qblk_t is exactly head h's scaled
    # logits for seed s (zeroed columns kill cross-head terms).
    logits = jnp.dot(k_flat.astype(compute_dtype),
                     qblk_t_ref[...].astype(compute_dtype),
                     preferred_element_type=jnp.float32)         # (bt*n, H*S)
    l3 = logits.reshape(bt, n, m)                                # keys on sublanes

    # ---- numerically stable softmax over keys (sublane reduce -> XLU,
    # ---- lane-dense exp -> EUP, approx reciprocal -> EUP) ----
    mx = jnp.max(l3, axis=1, keepdims=True)                      # (bt, 1, H*S)
    p = jnp.exp(l3 - mx)
    a = p * pl.reciprocal(jnp.sum(p, axis=1, keepdims=True), approx=True)

    # ---- context: contract the key axis directly from the (bt, n, H*S)
    # ---- layout (no transpose of A back to a padded layout) ----
    ctx = jnp.einsum('bnm,bnd->bmd', a.astype(compute_dtype),
                     v3.astype(compute_dtype),
                     preferred_element_type=jnp.float32)         # (bt, H*S, DIM)

    # ---- block-diagonal head selection (sublane-aligned, no lane shuffles) ---
    head_mask = hmask_ref[...]                                   # (H, 1, DIM)
    attn = jnp.sum(ctx.reshape(bt, nh, ns, d) * head_mask, axis=1)  # (bt, S, DIM)

    # ---- residual with projected seeds, then O + relu(fc_o(O)); ln=False ----
    o2 = (attn + q0_ref[...][None]).reshape(bt * ns, d)          # (bt*S, DIM)
    fo = jnp.dot(o2.astype(compute_dtype), wo_ref[...].astype(compute_dtype),
                 preferred_element_type=jnp.float32) + bo_ref[...]
    o2 = o2 + jnp.maximum(fo, 0.0)

    o_ref[...] = o2.reshape(bt, ns, d).astype(o_ref.dtype)


def _pick_batch_tile(batch, max_tile=256):
    """Largest divisor of `batch` that is <= max_tile while leaving >= 2 grid
    steps (so v7x's two TensorCores both get sharded work).  Awkward (prime)
    batches fall back to small tiles rather than one whole-batch tile that
    could blow past the scoped-VMEM limit."""
    if batch <= 1:
        return max(batch, 1)
    cap = max(1, min(max_tile, batch // 2))
    for cand in range(cap, 0, -1):
        if batch % cand == 0:
            return cand
    return 1


def pma_forward(X, S, Wq, bq, Wk, bk, Wv, bv, Wo, bo,
                *, b_tile=None, max_b_tile=256, compute_dtype=jnp.float32):
    B, N, D = X.shape
    assert (N, D) == (SET_LEN, DIM)

    # Batch-invariant seed-query projection, hoisted out of the kernel.
    q0 = S[0] @ Wq + bq                                          # (S, DIM)

    # Head-column mask, and the transposed, zero-padded, pre-scaled query block
    # (columns = heads*seeds so the in-kernel logits matmul is lane-dense).
    head_cols = (jnp.arange(DIM)[None, :] // DIM_SPLIT ==
                 jnp.arange(NUM_HEADS)[:, None]).astype(jnp.float32)  # (H, DIM)
    qblk = ((q0[None, :, :] * head_cols[:, None, :])
            .reshape(NUM_HEADS * NUM_SEEDS, DIM)) / math.sqrt(DIM)
    qblk_t = qblk.T                                              # (DIM, H*S)
    hmask = head_cols[:, None, :]                                # (H, 1, DIM)

    # Fused K/V projection parameters.
    wkv = jnp.concatenate([Wk, Wv], axis=1)                      # (DIM, 2*DIM)
    bkv = jnp.concatenate([bk, bv], axis=1)                      # (1, 2*DIM)

    if b_tile is None or B % b_tile != 0:
        b_tile = _pick_batch_tile(B, max_tile=max_b_tile)
    num_tiles = B // b_tile

    # Conservative scoped-VMEM budget: ~96 KiB of live padded f32 intermediates
    # per batch element + fixed headroom; clamp under v7x's 64 MiB/TC physical.
    vmem_limit = int(min(56 << 20, max(32 << 20, (8 << 20) + b_tile * (96 << 10))))

    kernel = functools.partial(_pma_kernel, compute_dtype=compute_dtype)
    const2 = lambda i: (0, 0)
    const3 = lambda i: (0, 0, 0)
    return pl.pallas_call(
        kernel,
        out_shape=jax.ShapeDtypeStruct((B, NUM_SEEDS, DIM), jnp.float32),
        grid=(num_tiles,),
        in_specs=[
            pl.BlockSpec((DIM, NUM_HEADS * NUM_SEEDS), const2),         # qblk^T
            pl.BlockSpec((NUM_SEEDS, DIM), const2),                     # q0
            pl.BlockSpec((NUM_HEADS, 1, DIM), const3),                  # head mask
            pl.BlockSpec((b_tile, SET_LEN, DIM), lambda i: (i, 0, 0)),  # X tile
            pl.BlockSpec((DIM, 2 * DIM), const2),                       # Wkv
            pl.BlockSpec((1, 2 * DIM), const2),                         # bkv
            pl.BlockSpec((DIM, DIM), const2),                           # Wo
            pl.BlockSpec((1, DIM), const2),                             # bo
        ],
        out_specs=pl.BlockSpec((b_tile, NUM_SEEDS, DIM), lambda i: (i, 0, 0)),
        compiler_params=pltpu.CompilerParams(
            dimension_semantics=("parallel",),
            vmem_limit_bytes=vmem_limit),
    )(qblk_t, q0, hmask, X, wkv, bkv, Wo, bo)


def pma_reference(X, S, Wq, bq, Wk, bk, Wv, bv, Wo, bo):
    """Pure-JAX reference reproducing the PyTorch semantics (ln=False)."""
    B = X.shape[0]
    Q = jnp.broadcast_to(S, (B, NUM_SEEDS, DIM)) @ Wq + bq
    K = X @ Wk + bk
    V = X @ Wv + bv
    # split along feature dim, concat along batch dim (torch.cat(split, 0))
    split = lambda T: jnp.concatenate(
        [T[:, :, h * DIM_SPLIT:(h + 1) * DIM_SPLIT] for h in range(NUM_HEADS)], 0)
    Q_, K_, V_ = split(Q), split(K), split(V)
    A = jax.nn.softmax(jnp.einsum('bsd,bnd->bsn', Q_, K_) / math.sqrt(DIM), axis=2)
    O_ = Q_ + jnp.einsum('bsn,bnd->bsd', A, V_)
    O = jnp.concatenate([O_[h * B:(h + 1) * B] for h in range(NUM_HEADS)], 2)
    return O + jax.nn.relu(O @ Wo + bo)


if __name__ == "__main__":
    key = jax.random.PRNGKey(0)
    ks = jax.random.split(key, 11)

    # Deterministic parameter init (synthetic; not a checkpoint load).
    xavier_bound = math.sqrt(6.0 / (NUM_SEEDS * DIM + DIM))
    S = jax.random.uniform(ks[0], (1, NUM_SEEDS, DIM), jnp.float32,
                           -xavier_bound, xavier_bound)
    lin_bound = 1.0 / math.sqrt(DIM)
    mk_w = lambda k: jax.random.uniform(k, (DIM, DIM), jnp.float32, -lin_bound, lin_bound)
    mk_b = lambda k: jax.random.uniform(k, (1, DIM), jnp.float32, -lin_bound, lin_bound)
    Wq, bq = mk_w(ks[1]), mk_b(ks[2])
    Wk, bk = mk_w(ks[3]), mk_b(ks[4])
    Wv, bv = mk_w(ks[5]), mk_b(ks[6])
    Wo, bo = mk_w(ks[7]), mk_b(ks[8])

    X = jax.random.normal(ks[9], (BATCH, SET_LEN, DIM), jnp.float32)

    out = pma_forward(X, S, Wq, bq, Wk, bk, Wv, bv, Wo, bo)
    out = jax.block_until_ready(out)

    ref = pma_reference(X, S, Wq, bq, Wk, bk, Wv, bv, Wo, bo)
    assert out.shape == (BATCH, NUM_SEEDS, DIM)
    # approx reciprocal (EUP vrcp) in the softmax costs a few 1e-4 of accuracy
    assert jnp.allclose(out, ref, atol=2e-3, rtol=2e-3)

    print("KERNEL_OK")
</pallas_src>

<mosaic_0001>
module attributes {stable_mosaic.version = 11 : i64} {
  func.func @_pma_kernel(%arg0: i32, %arg1: memref<32x32xf32, #tpu.memory_space<vmem>>, %arg2: memref<8x32xf32, #tpu.memory_space<vmem>>, %arg3: memref<4x1x32xf32, #tpu.memory_space<vmem>>, %arg4: memref<1x16x32xf32, #tpu.memory_space<vmem>>, %arg5: memref<32x64xf32, #tpu.memory_space<vmem>>, %arg6: memref<1x64xf32, #tpu.memory_space<vmem>>, %arg7: memref<32x32xf32, #tpu.memory_space<vmem>>, %arg8: memref<1x32xf32, #tpu.memory_space<vmem>>, %arg9: memref<1x8x32xf32, #tpu.memory_space<vmem>>) attributes {dimension_semantics = [#tpu.dimension_semantics<parallel>], iteration_bounds = array<i64: 2>, scalar_prefetch = 0 : i64, scratch_operands = 0 : i64, tpu.core_type = #tpu.core_type<tc>, window_params = [{pipeline_mode = #tpu.pipeline_mode<synchronous>, transform_indices = @transform_0, window_bounds = array<i64: 32, 32>}, {pipeline_mode = #tpu.pipeline_mode<synchronous>, transform_indices = @transform_1, window_bounds = array<i64: 8, 32>}, {pipeline_mode = #tpu.pipeline_mode<synchronous>, transform_indices = @transform_2, window_bounds = array<i64: 4, 1, 32>}, {transform_indices = @transform_3, window_bounds = array<i64: 1, 16, 32>}, {pipeline_mode = #tpu.pipeline_mode<synchronous>, transform_indices = @transform_4, window_bounds = array<i64: 32, 64>}, {pipeline_mode = #tpu.pipeline_mode<synchronous>, transform_indices = @transform_5, window_bounds = array<i64: 1, 64>}, {pipeline_mode = #tpu.pipeline_mode<synchronous>, transform_indices = @transform_6, window_bounds = array<i64: 32, 32>}, {pipeline_mode = #tpu.pipeline_mode<synchronous>, transform_indices = @transform_7, window_bounds = array<i64: 1, 32>}, {transform_indices = @transform_8, window_bounds = array<i64: 1, 8, 32>}]} {
    %c0 = arith.constant 0 : index
    %c0_0 = arith.constant 0 : index
    %c0_1 = arith.constant 0 : index
    %0 = vector.load %arg4[%c0, %c0_0, %c0_1] : memref<1x16x32xf32, #tpu.memory_space<vmem>>, vector<1x16x32xf32>
    %1 = vector.shape_cast %0 : vector<1x16x32xf32> to vector<16x32xf32>
    %c0_2 = arith.constant 0 : index
    %c0_3 = arith.constant 0 : index
    %2 = vector.load %arg5[%c0_2, %c0_3] : memref<32x64xf32, #tpu.memory_space<vmem>>, vector<32x64xf32>
    %cst = arith.constant dense<0.000000e+00> : vector<16x64xf32>
    %3 = tpu.matmul %1, %2, %cst {dimension_numbers = #tpu.dot_dimension_numbers<[1], [0], [0], [1], [0, 0, 1, 1], [], []>} : vector<16x32xf32>, vector<32x64xf32>, vector<16x64xf32> -> vector<16x64xf32>
    %c0_4 = arith.constant 0 : index
    %c0_5 = arith.constant 0 : index
    %4 = vector.load %arg6[%c0_4, %c0_5] : memref<1x64xf32, #tpu.memory_space<vmem>>, vector<1x64xf32>
    %5 = vector.broadcast %4 : vector<1x64xf32> to vector<16x64xf32>
    %6 = arith.addf %3, %5 : vector<16x64xf32>
    %7 = vector.extract_strided_slice %6 {offsets = [0, 0], sizes = [16, 32], strides = [1, 1]} : vector<16x64xf32> to vector<16x32xf32>
    %8 = vector.extract_strided_slice %6 {offsets = [0, 32], sizes = [16, 32], strides = [1, 1]} : vector<16x64xf32> to vector<16x32xf32>
    %9 = vector.shape_cast %8 : vector<16x32xf32> to vector<1x16x32xf32>
    %c0_6 = arith.constant 0 : index
    %c0_7 = arith.constant 0 : index
    %10 = vector.load %arg1[%c0_6, %c0_7] : memref<32x32xf32, #tpu.memory_space<vmem>>, vector<32x32xf32>
    %cst_8 = arith.constant dense<0.000000e+00> : vector<16x32xf32>
    %11 = tpu.matmul %7, %10, %cst_8 {dimension_numbers = #tpu.dot_dimension_numbers<[1], [0], [0], [1], [0, 0, 1, 1], [], []>} : vector<16x32xf32>, vector<32x32xf32>, vector<16x32xf32> -> vector<16x32xf32>
    %12 = vector.shape_cast %11 : vector<16x32xf32> to vector<1x16x32xf32>
    %cst_9 = arith.constant dense<0xFF800000> : vector<1x32xf32>
    %13 = vector.multi_reduction <maximumf>, %12, %cst_9 [1] : vector<1x16x32xf32> to vector<1x32xf32>
    %14 = vector.shape_cast %13 : vector<1x32xf32> to vector<1x1x32xf32>
    %15 = vector.broadcast %14 : vector<1x1x32xf32> to vector<1x16x32xf32>
    %16 = arith.subf %12, %15 : vector<1x16x32xf32>
    %17 = math.exp %16 : vector<1x16x32xf32>
    %cst_10 = arith.constant dense<0.000000e+00> : vector<1x32xf32>
    %18 = vector.multi_reduction <add>, %17, %cst_10 [1] : vector<1x16x32xf32> to vector<1x32xf32>
    %19 = vector.shape_cast %18 : vector<1x32xf32> to vector<1x1x32xf32>
    %20 = tpu.reciprocal %19 {approx = true} : vector<1x1x32xf32> -> vector<1x1x32xf32>
    %21 = vector.broadcast %20 : vector<1x1x32xf32> to vector<1x16x32xf32>
    %22 = arith.mulf %17, %21 : vector<1x16x32xf32>
    "tpu.trace_start"() <{level = 10 : i32, message = "bnm,bnd->bmd"}> : () -> ()
    %cst_11 = arith.constant dense<0.000000e+00> : vector<1x32x32xf32>
    %23 = tpu.matmul %22, %9, %cst_11 {dimension_numbers = #tpu.dot_dimension_numbers<[1], [1], [2], [2], [0, 0, 0, 2, 1, 2], [0], [0]>} : vector<1x16x32xf32>, vector<1x16x32xf32>, vector<1x32x32xf32> -> vector<1x32x32xf32>
    "tpu.trace_stop"() : () -> ()
    %c0_12 = arith.constant 0 : index
    %c0_13 = arith.constant 0 : index
    %c0_14 = arith.constant 0 : index
    %24 = vector.load %arg3[%c0_12, %c0_13, %c0_14] : memref<4x1x32xf32, #tpu.memory_space<vmem>>, vector<4x1x32xf32>
    %25 = vector.shape_cast %23 : vector<1x32x32xf32> to vector<1x4x8x32xf32>
    %26 = vector.shape_cast %24 : vector<4x1x32xf32> to vector<1x4x1x32xf32>
    %27 = vector.broadcast %26 : vector<1x4x1x32xf32> to vector<1x4x8x32xf32>
    %28 = arith.mulf %25, %27 : vector<1x4x8x32xf32>
    %cst_15 = arith.constant dense<0.000000e+00> : vector<1x8x32xf32>
    %29 = vector.multi_reduction <add>, %28, %cst_15 [1] : vector<1x4x8x32xf32> to vector<1x8x32xf32>
    %c0_16 = arith.constant 0 : index
    %c0_17 = arith.constant 0 : index
    %30 = vector.load %arg2[%c0_16, %c0_17] : memref<8x32xf32, #tpu.memory_space<vmem>>, vector<8x32xf32>
    %31 = vector.shape_cast %30 : vector<8x32xf32> to vector<1x8x32xf32>
    %32 = arith.addf %29, %31 : vector<1x8x32xf32>
    %33 = vector.shape_cast %32 : vector<1x8x32xf32> to vector<8x32xf32>
    %c0_18 = arith.constant 0 : index
    %c0_19 = arith.constant 0 : index
    %34 = vector.load %arg7[%c0_18, %c0_19] : memref<32x32xf32, #tpu.memory_space<vmem>>, vector<32x32xf32>
    %cst_20 = arith.constant dense<0.000000e+00> : vector<8x32xf32>
    %35 = tpu.matmul %33, %34, %cst_20 {dimension_numbers = #tpu.dot_dimension_numbers<[1], [0], [0], [1], [0, 0, 1, 1], [], []>} : vector<8x32xf32>, vector<32x32xf32>, vector<8x32xf32> -> vector<8x32xf32>
    %c0_21 = arith.constant 0 : index
    %c0_22 = arith.constant 0 : index
    %36 = vector.load %arg8[%c0_21, %c0_22] : memref<1x32xf32, #tpu.memory_space<vmem>>, vector<1x32xf32>
    %37 = vector.broadcast %36 : vector<1x32xf32> to vector<8x32xf32>
    %38 = arith.addf %35, %37 : vector<8x32xf32>
    %cst_23 = arith.constant 0.000000e+00 : f32
    %39 = vector.broadcast %cst_23 : f32 to vector<8x32xf32>
    %40 = arith.maximumf %38, %39 : vector<8x32xf32>
    %41 = arith.addf %33, %40 : vector<8x32xf32>
    %42 = vector.shape_cast %41 : vector<8x32xf32> to vector<1x8x32xf32>
    %c0_24 = arith.constant 0 : index
    %c0_25 = arith.constant 0 : index
    %c0_26 = arith.constant 0 : index
    %43 = vector.load %arg9[%c0_24, %c0_25, %c0_26] : memref<1x8x32xf32, #tpu.memory_space<vmem>>, vector<1x8x32xf32>
    tpu.vector_store %arg9[%c0_24, %c0_25, %c0_26], %42 {strides = array<i32>} : memref<1x8x32xf32, #tpu.memory_space<vmem>>, vector<1x8x32xf32>,
    return
  }
  func.func @transform_0(%arg0: i32) -> (i32, i32) {
    %c0_i32 = arith.constant 0 : i32
    %c0_i32_0 = arith.constant 0 : i32
    %c0_i32_1 = arith.constant 0 : i32
    return %c0_i32, %c0_i32_0 : i32, i32
  }
  func.func @transform_1(%arg0: i32) -> (i32, i32) {
    %c0_i32 = arith.constant 0 : i32
    %c0_i32_0 = arith.constant 0 : i32
    %c0_i32_1 = arith.constant 0 : i32
    return %c0_i32, %c0_i32_0 : i32, i32
  }
  func.func @transform_2(%arg0: i32) -> (i32, i32, i32) {
    %c0_i32 = arith.constant 0 : i32
    %c0_i32_0 = arith.constant 0 : i32
    %c0_i32_1 = arith.constant 0 : i32
    %c0_i32_2 = arith.constant 0 : i32
    return %c0_i32, %c0_i32_0, %c0_i32_1 : i32, i32, i32
  }
  func.func @transform_3(%arg0: i32) -> (i32, i32, i32) {
    %c0_i32 = arith.constant 0 : i32
    %c0_i32_0 = arith.constant 0 : i32
    %c0_i32_1 = arith.constant 0 : i32
    return %arg0, %c0_i32, %c0_i32_0 : i32, i32, i32
  }
  func.func @transform_4(%arg0: i32) -> (i32, i32) {
    %c0_i32 = arith.constant 0 : i32
    %c0_i32_0 = arith.constant 0 : i32
    %c0_i32_1 = arith.constant 0 : i32
    return %c0_i32, %c0_i32_0 : i32, i32
  }
  func.func @transform_5(%arg0: i32) -> (i32, i32) {
    %c0_i32 = arith.constant 0 : i32
    %c0_i32_0 = arith.constant 0 : i32
    %c0_i32_1 = arith.constant 0 : i32
    return %c0_i32, %c0_i32_0 : i32, i32
  }
  func.func @transform_6(%arg0: i32) -> (i32, i32) {
    %c0_i32 = arith.constant 0 : i32
    %c0_i32_0 = arith.constant 0 : i32
    %c0_i32_1 = arith.constant 0 : i32
    return %c0_i32, %c0_i32_0 : i32, i32
  }
  func.func @transform_7(%arg0: i32) -> (i32, i32) {
    %c0_i32 = arith.constant 0 : i32
    %c0_i32_0 = arith.constant 0 : i32
    %c0_i32_1 = arith.constant 0 : i32
    return %c0_i32, %c0_i32_0 : i32, i32
  }
  func.func @transform_8(%arg0: i32) -> (i32, i32, i32) {
    %c0_i32 = arith.constant 0 : i32
    %c0_i32_0 = arith.constant 0 : i32
    %c0_i32_1 = arith.constant 0 : i32
    return %arg0, %c0_i32, %c0_i32_0 : i32, i32, i32
  }
}

</mosaic_0001>

<llo_original>
// kernel: tpu_custom_call.1
$region0: #{tpu_custom_call.1}
  #allocation0 [shape = 'u32[]', space=smem, size = 0x4, offset = 0x4, fixed_abs, tag = 'smem constant byte address 0x4 - core index']
  #allocation1 [shape = 'u32[144,128]{1,0:T(1,128)}', space=vmem, size = 0x12000, scoped, tag = 'internal scratch']
  %s0 = inlined_call_operand.hbm [shape: f32[32,32], index: 0, kind: input, shape index: {}]
  %s1 = inlined_call_operand.hbm [shape: f32[8,32], index: 1, kind: input, shape index: {}]
  %s2 = inlined_call_operand.vmem [shape: f32[4,1,32], index: 2, kind: input, shape index: {}]
  %s3 = inlined_call_operand.hbm [shape: f32[2,16,32], index: 3, kind: input, shape index: {}]
  %s4 = inlined_call_operand.hbm [shape: f32[32,64], index: 4, kind: input, shape index: {}]
  %s5 = inlined_call_operand.vmem [shape: f32[1,64], index: 5, kind: input, shape index: {}]
  %s6 = inlined_call_operand.hbm [shape: f32[32,32], index: 6, kind: input, shape index: {}]
  %s7 = inlined_call_operand.vmem [shape: f32[1,32], index: 7, kind: input, shape index: {}]
  %s8 = inlined_call_operand.hbm [shape: f32[2,8,32], index: 8, kind: output, shape index: {}]
  %s9 = sld [smem:[#allocation0]]
  $region85: #{tpu_custom_call.1} parent=0
    _
  %s11 = ssub.s32 1, %s9
  %s12 = scalar_select 0, %s11, %s9
  $region1: #{tpu_custom_call.1} parent=0
    #allocation2 [shape = 'u8[16384]{0}', space=vmem, size = 0x4000, scoped, tag = 'input window, operand 0, single buffered']
    #allocation3 [shape = 's32[2]{0}', space=sflag, size = 0x8, scoped, tag = 'scoped memory for tpu_custom_call.1']
    #allocation4 [shape = 's32[2]{0}', space=sflag, size = 0x8, scoped, tag = 'scoped memory for tpu_custom_call.1']
    #allocation5 [shape = 'u8[4096]{0}', space=vmem, size = 0x1000, scoped, tag = 'input window, operand 1, single buffered']
    #allocation6 [shape = 's32[1]{0}', space=sflag, size = 0x4, scoped, tag = 'scoped memory for tpu_custom_call.1']
    #allocation7 [shape = 'u8[16384]{0}', space=vmem, size = 0x4000, scoped, tag = 'input window, operand 3']
    #allocation8 [shape = 'u8[16384]{0}', space=vmem, size = 0x4000, scoped, tag = 'input window, operand 4, single buffered']
    #allocation9 [shape = 'u8[16384]{0}', space=vmem, size = 0x4000, scoped, tag = 'input window, operand 6, single buffered']
    #allocation10 [shape = 's32[1]{0}', space=sflag, size = 0x4, scoped, tag = 'scoped memory for tpu_custom_call.1']
    #allocation11 [shape = 'u8[8192]{0}', space=vmem, size = 0x2000, scoped, tag = 'output window, operand 0']
    %13 = vsyncpa [#allocation3], 0
    %14 = vsyncpa [#allocation6], 0
    %15 = vsyncpa [#allocation10], 0
    %16 = vsyncpa [#allocation4], 0
    %s17 = scalar_lea.sflag [#allocation4], 1
    %18 = vsyncpa %s17, 0
    loop: start=0, step=1, limit=4
    $region2: #{tpu_custom_call.1} parent=1 // loop_pre_header
      _
    $region3: #{tpu_custom_call.1} parent=1 // loop_header
      %s20 = sphi 0, %s24
      %p21 = scmp.ge.s32.totalorder %s20, 4
      %s28 = sphi 0, %s28
      %s30 = sphi 0, %s28
      %s31 = sphi 0, %s30
      %s45 = sphi 0, %s31
      %s49 = sphi 0, %s49
      %s51 = sphi 0, %s49
      %s52 = sphi 0, %s51
      %s66 = sphi 0, %s52
      %s70 = sphi 0, %s70
      %s72 = sphi 0, %s70
      %s73 = sphi 0, %s72
      %s87 = sphi 0, %s73
      %s93 = sphi 0, %s95
      %s96 = sphi 0, %s93
      %s97 = sphi 0, %s96
      %s113 = sphi 0, %s97
      %s117 = sphi 0, %s117
      %s119 = sphi 0, %s117
      %s120 = sphi 0, %s119
      %s134 = sphi 0, %s120
      %s138 = sphi 0, %s138
      %s140 = sphi 0, %s138
      %s141 = sphi 0, %s140
      %s155 = sphi 0, %s141
      %s159 = sphi 0, %s159
      %s161 = sphi 0, %s159
      %s162 = sphi 0, %s161
      %s176 = sphi 0, %s162
      %s180 = sphi 0, %s180
      %s182 = sphi 0, %s180
      %s183 = sphi 0, %s182
      %s197 = sphi 0, %s183
      %s203 = sphi 0, %s205
      %s206 = sphi 0, %s203
      %s207 = sphi 0, %s206
      %s223 = sphi 0, %s207
    $region4: #{tpu_custom_call.1} parent=1 // loop_header_branch
      %23 = sbr.rel (%p21) target = $region8
    $region5: #{tpu_custom_call.1} parent=1 // loop_body
      %s25 = ssub.s32 %s20, 1
      %s26 = ssub.s32 %s20, 2
      %s27 = sadd.s32 %s20, 1
      %s29 = sadd.s32 %s28, 1
      %p32 = scmp.eq.s32.totalorder %s20, 1
      %p33 = scmp.ne.s32.totalorder %s28, %s30
      %p34 = scmp.eq.s32.totalorder %s20, 0
      %p35 = por %p33, %p34
      %p36 = scmp.ne.s32.totalorder %s28, %s30
      %p37 = scmp.eq.s32.totalorder %s25, 1
      %p38 = por %p36, %p37
      %p39 = scmp.ne.s32.totalorder %s30, %s31
      %p40 = scmp.eq.s32.totalorder %s25, 0
      %p41 = por %p39, %p40
      %p42 = scmp.ne.s32.totalorder %s30, %s31
      %p43 = scmp.eq.s32.totalorder %s26, 1
      %p44 = por %p42, %p43
      %p46 = scmp.ne.s32.totalorder %s31, %s45
      %p47 = scmp.eq.s32.totalorder %s26, 0
      %p48 = por %p46, %p47
      %s50 = sadd.s32 %s49, 1
      %p53 = scmp.eq.s32.totalorder %s20, 1
      %p54 = scmp.ne.s32.totalorder %s49, %s51
      %p55 = scmp.eq.s32.totalorder %s20, 0
      %p56 = por %p54, %p55
      %p57 = scmp.ne.s32.totalorder %s49, %s51
      %p58 = scmp.eq.s32.totalorder %s25, 1
      %p59 = por %p57, %p58
      %p60 = scmp.ne.s32.totalorder %s51, %s52
      %p61 = scmp.eq.s32.totalorder %s25, 0
      %p62 = por %p60, %p61
      %p63 = scmp.ne.s32.totalorder %s51, %s52
      %p64 = scmp.eq.s32.totalorder %s26, 1
      %p65 = por %p63, %p64
      %p67 = scmp.ne.s32.totalorder %s52, %s66
      %p68 = scmp.eq.s32.totalorder %s26, 0
      %p69 = por %p67, %p68
      %s71 = sadd.s32 %s70, 1
      %p74 = scmp.eq.s32.totalorder %s20, 1
      %p75 = scmp.ne.s32.totalorder %s70, %s72
      %p76 = scmp.eq.s32.totalorder %s20, 0
      %p77 = por %p75, %p76
      %p78 = scmp.ne.s32.totalorder %s70, %s72
      %p79 = scmp.eq.s32.totalorder %s25, 1
      %p80 = por %p78, %p79
      %p81 = scmp.ne.s32.totalorder %s72, %s73
      %p82 = scmp.eq.s32.totalorder %s25, 0
      %p83 = por %p81, %p82
      %p84 = scmp.ne.s32.totalorder %s72, %s73
      %p85 = scmp.eq.s32.totalorder %s26, 1
      %p86 = por %p84, %p85
      %p88 = scmp.ne.s32.totalorder %s73, %s87
      %p89 = scmp.eq.s32.totalorder %s26, 0
      %p90 = por %p88, %p89
      %s91 = ssub.s32 %s20, %s27
      %p92 = scmp.eq.s32.totalorder %s91, 0
      %s94 = sadd.s32 %s93, 1
      %s95 = scalar_select %p92, %s93, %s94
      %p98 = pneg %p92
      %p99 = scmp.eq.s32.totalorder %s20, 1
      %p100 = por %p98, %p99
      %p101 = scmp.ne.s32.totalorder %s93, %s96
      %p102 = scmp.eq.s32.totalorder %s20, 0
      %p103 = por %p101, %p102
      %p104 = scmp.ne.s32.totalorder %s93, %s96
      %p105 = scmp.eq.s32.totalorder %s25, 1
      %p106 = por %p104, %p105
      %p107 = scmp.ne.s32.totalorder %s96, %s97
      %p108 = scmp.eq.s32.totalorder %s25, 0
      %p109 = por %p107, %p108
      %p110 = scmp.ne.s32.totalorder %s96, %s97
      %p111 = scmp.eq.s32.totalorder %s26, 1
      %p112 = por %p110, %p111
      %p114 = scmp.ne.s32.totalorder %s97, %s113
      %p115 = scmp.eq.s32.totalorder %s26, 0
      %p116 = por %p114, %p115
      %s118 = sadd.s32 %s117, 1
      %p121 = scmp.eq.s32.totalorder %s20, 1
      %p122 = scmp.ne.s32.totalorder %s117, %s119
      %p123 = scmp.eq.s32.totalorder %s20, 0
      %p124 = por %p122, %p123
      %p125 = scmp.ne.s32.totalorder %s117, %s119
      %p126 = scmp.eq.s32.totalorder %s25, 1
      %p127 = por %p125, %p126
      %p128 = scmp.ne.s32.totalorder %s119, %s120
      %p129 = scmp.eq.s32.totalorder %s25, 0
      %p130 = por %p128, %p129
      %p131 = scmp.ne.s32.totalorder %s119, %s120
      %p132 = scmp.eq.s32.totalorder %s26, 1
      %p133 = por %p131, %p132
      %p135 = scmp.ne.s32.totalorder %s120, %s134
      %p136 = scmp.eq.s32.totalorder %s26, 0
      %p137 = por %p135, %p136
      %s139 = sadd.s32 %s138, 1
      %p142 = scmp.eq.s32.totalorder %s20, 1
      %p143 = scmp.ne.s32.totalorder %s138, %s140
      %p144 = scmp.eq.s32.totalorder %s20, 0
      %p145 = por %p143, %p144
      %p146 = scmp.ne.s32.totalorder %s138, %s140
      %p147 = scmp.eq.s32.totalorder %s25, 1
      %p148 = por %p146, %p147
      %p149 = scmp.ne.s32.totalorder %s140, %s141
      %p150 = scmp.eq.s32.totalorder %s25, 0
      %p151 = por %p149, %p150
      %p152 = scmp.ne.s32.totalorder %s140, %s141
      %p153 = scmp.eq.s32.totalorder %s26, 1
      %p154 = por %p152, %p153
      %p156 = scmp.ne.s32.totalorder %s141, %s155
      %p157 = scmp.eq.s32.totalorder %s26, 0
      %p158 = por %p156, %p157
      %s160 = sadd.s32 %s159, 1
      %p163 = scmp.eq.s32.totalorder %s20, 1
      %p164 = scmp.ne.s32.totalorder %s159, %s161
      %p165 = scmp.eq.s32.totalorder %s20, 0
      %p166 = por %p164, %p165
      %p167 = scmp.ne.s32.totalorder %s159, %s161
      %p168 = scmp.eq.s32.totalorder %s25, 1
      %p169 = por %p167, %p168
      %p170 = scmp.ne.s32.totalorder %s161, %s162
      %p171 = scmp.eq.s32.totalorder %s25, 0
      %p172 = por %p170, %p171
      %p173 = scmp.ne.s32.totalorder %s161, %s162
      %p174 = scmp.eq.s32.totalorder %s26, 1
      %p175 = por %p173, %p174
      %p177 = scmp.ne.s32.totalorder %s162, %s176
      %p178 = scmp.eq.s32.totalorder %s26, 0
      %p179 = por %p177, %p178
      %s181 = sadd.s32 %s180, 1
      %p184 = scmp.eq.s32.totalorder %s20, 1
      %p185 = scmp.ne.s32.totalorder %s180, %s182
      %p186 = scmp.eq.s32.totalorder %s20, 0
      %p187 = por %p185, %p186
      %p188 = scmp.ne.s32.totalorder %s180, %s182
      %p189 = scmp.eq.s32.totalorder %s25, 1
      %p190 = por %p188, %p189
      %p191 = scmp.ne.s32.totalorder %s182, %s183
      %p192 = scmp.eq.s32.totalorder %s25, 0
      %p193 = por %p191, %p192
      %p194 = scmp.ne.s32.totalorder %s182, %s183
      %p195 = scmp.eq.s32.totalorder %s26, 1
      %p196 = por %p194, %p195
      %p198 = scmp.ne.s32.totalorder %s183, %s197
      %p199 = scmp.eq.s32.totalorder %s26, 0
      %p200 = por %p198, %p199
      %s201 = ssub.s32 %s20, %s27
      %p202 = scmp.eq.s32.totalorder %s201, 0
      %s204 = sadd.s32 %s203, 1
      %s205 = scalar_select %p202, %s203, %s204
      %p208 = pneg %p202
      %p209 = scmp.eq.s32.totalorder %s20, 1
      %p210 = por %p208, %p209
      %p211 = scmp.ne.s32.totalorder %s203, %s206
      %p212 = scmp.eq.s32.totalorder %s20, 0
      %p213 = por %p211, %p212
      %p214 = scmp.ne.s32.totalorder %s203, %s206
      %p215 = scmp.eq.s32.totalorder %s25, 1
      %p216 = por %p214, %p215
      %p217 = scmp.ne.s32.totalorder %s206, %s207
      %p218 = scmp.eq.s32.totalorder %s25, 0
      %p219 = por %p217, %p218
      %p220 = scmp.ne.s32.totalorder %s206, %s207
      %p221 = scmp.eq.s32.totalorder %s26, 1
      %p222 = por %p220, %p221
      %p224 = scmp.ne.s32.totalorder %s207, %s223
      %p225 = scmp.eq.s32.totalorder %s26, 0
      %p226 = por %p224, %p225
      %p227 = scmp.le.s32.totalorder 1, %s20
      %p228 = scmp.lt.s32.totalorder %s20, 3
      %p229 = pnand %p227, %p228
      %p230 = pneg %p229
      // Predicated region
      $region9: #{tpu_custom_call.1} parent=5 // pred_check
        _
      $region10: #{tpu_custom_call.1} parent=5 // pred_check_branch
        %232 = sbr.rel (%p229) target = $region12
      $region11: #{tpu_custom_call.1} parent=5 // pred_region
        %s233 = ssub.s32 %s20, 1
        // Predicated region
        $region13: #{tpu_custom_call.1} parent=11 // pred_check
          %p234 = pneg %p41
        $region14: #{tpu_custom_call.1} parent=11 // pred_check_branch
          %236 = sbr.rel (%p234) target = $region16
        $region15: #{tpu_custom_call.1} parent=11 // pred_region
          %s238 = ssub.s32 512, 512
          %239 = vsyncadd [#allocation3], %s238
          %s240 = sshll.u32 [#allocation2], 4
          %s241 = int_to_ptr.vmem [resolvable:$true] %s240
          %246 = dma.hbm_to_vmem [thread:$0]  %s0, 512, %s241, [#allocation3], 128, 128, 8
        $region16: #{tpu_custom_call.1} parent=11 // pred_fallthru
          _
        // Predicated region
        $region17: #{tpu_custom_call.1} parent=11 // pred_check
          %p247 = pneg %p62
        $region18: #{tpu_custom_call.1} parent=11 // pred_check_branch
          %249 = sbr.rel (%p247) target = $region20
        $region19: #{tpu_custom_call.1} parent=11 // pred_region
          %s251 = ssub.s32 128, 128
          %252 = vsyncadd [#allocation6], %s251
          %s254 = sshll.u32 [#allocation5], 4
          %s255 = int_to_ptr.vmem [resolvable:$true] %s254
          %257 = dma.hbm_to_vmem [thread:$0]  %s1, 128, %s255, [#allocation6]
        $region20: #{tpu_custom_call.1} parent=11 // pred_fallthru
          _
        // Predicated region
        $region21: #{tpu_custom_call.1} parent=11 // pred_check
          %p258 = pneg %p83
        $region22: #{tpu_custom_call.1} parent=11 // pred_check_branch
          %260 = sbr.rel (%p258) target = $region24
        $region23: #{tpu_custom_call.1} parent=11 // pred_region
          _
        $region24: #{tpu_custom_call.1} parent=11 // pred_fallthru
          _
        // Predicated region
        $region25: #{tpu_custom_call.1} parent=11 // pred_check
          %p261 = pneg %p130
        $region26: #{tpu_custom_call.1} parent=11 // pred_check_branch
          %263 = sbr.rel (%p261) target = $region28
        $region27: #{tpu_custom_call.1} parent=11 // pred_region
          %s265 = ssub.s32 512, 512
          %266 = vsyncadd [#allocation6], %s265
          %s267 = sshll.u32 [#allocation8], 4
          %s268 = int_to_ptr.vmem [resolvable:$true] %s267
          %273 = dma.hbm_to_vmem [thread:$0]  %s4, 512, %s268, [#allocation6], 128, 128, 8
        $region28: #{tpu_custom_call.1} parent=11 // pred_fallthru
          _
        // Predicated region
        $region29: #{tpu_custom_call.1} parent=11 // pred_check
          %p274 = pneg %p151
        $region30: #{tpu_custom_call.1} parent=11 // pred_check_branch
          %276 = sbr.rel (%p274) target = $region32
        $region31: #{tpu_custom_call.1} parent=11 // pred_region
          _
        $region32: #{tpu_custom_call.1} parent=11 // pred_fallthru
          _
        // Predicated region
        $region33: #{tpu_custom_call.1} parent=11 // pred_check
          %p277 = pneg %p172
        $region34: #{tpu_custom_call.1} parent=11 // pred_check_branch
          %279 = sbr.rel (%p277) target = $region36
        $region35: #{tpu_custom_call.1} parent=11 // pred_region
          %s281 = ssub.s32 512, 512
          %282 = vsyncadd [#allocation10], %s281
          %s283 = sshll.u32 [#allocation9], 4
          %s284 = int_to_ptr.vmem [resolvable:$true] %s283
          %289 = dma.hbm_to_vmem [thread:$0]  %s6, 512, %s284, [#allocation10], 128, 128, 8
        $region36: #{tpu_custom_call.1} parent=11 // pred_fallthru
          _
        // Predicated region
        $region37: #{tpu_custom_call.1} parent=11 // pred_check
          %p290 = pneg %p193
        $region38: #{tpu_custom_call.1} parent=11 // pred_check_branch
          %292 = sbr.rel (%p290) target = $region40
        $region39: #{tpu_custom_call.1} parent=11 // pred_region
          _
        $region40: #{tpu_custom_call.1} parent=11 // pred_fallthru
          _
      $region12: #{tpu_custom_call.1} parent=5 // pred_fallthru
        _
      %p293 = scmp.lt.s32.totalorder %s20, 2
      // Predicated region
      $region41: #{tpu_custom_call.1} parent=5 // pred_check
        %p294 = pneg %p293
      $region42: #{tpu_custom_call.1} parent=5 // pred_check_branch
        %296 = sbr.rel (%p294) target = $region44
      $region43: #{tpu_custom_call.1} parent=5 // pred_region
        // Predicated region
        $region45: #{tpu_custom_call.1} parent=43 // pred_check
          %p297 = pneg %p103
        $region46: #{tpu_custom_call.1} parent=43 // pred_check_branch
          %299 = sbr.rel (%p297) target = $region48
        $region47: #{tpu_custom_call.1} parent=43 // pred_region
          %s300 = sand.u32 %s20, 1
          %s301 = scalar_lea.sflag [#allocation3], %s300
          %s302 = sand.u32 %s93, 1
          %s303 = smul.addr %s302, 16
          %s304 = scalar_lea.vmem [#allocation7], %s303
          %s306 = ssub.s32 256, 256
          %307 = vsyncadd %s301, %s306
          %s308 = smul.addr %s20, 2
          %s309 = smul.addr %s308, 128
          %s310 = scalar_lea.hbm %s3, %s309
          %s311 = sshll.u32 %s304, 4
          %s312 = int_to_ptr.vmem [resolvable:$true] %s311
          %317 = dma.hbm_to_vmem [thread:$0]  %s310, 256, %s312, %s301, 128, 128, 8
        $region48: #{tpu_custom_call.1} parent=43 // pred_fallthru
          _
      $region44: #{tpu_custom_call.1} parent=5 // pred_fallthru
        _
      %p318 = scmp.le.s32.totalorder 1, %s20
      %p319 = scmp.lt.s32.totalorder %s20, 3
      %p320 = pnand %p318, %p319
      %p321 = pneg %p320
      // Predicated region
      $region49: #{tpu_custom_call.1} parent=5 // pred_check
        _
      $region50: #{tpu_custom_call.1} parent=5 // pred_check_branch
        %323 = sbr.rel (%p320) target = $region52
      $region51: #{tpu_custom_call.1} parent=5 // pred_region
        %s324 = ssub.s32 %s20, 1
        // Predicated region
        $region53: #{tpu_custom_call.1} parent=51 // pred_check
          %p325 = pneg %p41
        $region54: #{tpu_custom_call.1} parent=51 // pred_check_branch
          %327 = sbr.rel (%p325) target = $region56
        $region55: #{tpu_custom_call.1} parent=51 // pred_region
          %328 = dma.done [#allocation3], 512
        $region56: #{tpu_custom_call.1} parent=51 // pred_fallthru
          _
        // Predicated region
        $region57: #{tpu_custom_call.1} parent=51 // pred_check
          %p329 = pneg %p62
        $region58: #{tpu_custom_call.1} parent=51 // pred_check_branch
          %331 = sbr.rel (%p329) target = $region60
        $region59: #{tpu_custom_call.1} parent=51 // pred_region
          %332 = dma.done [#allocation6], 128
        $region60: #{tpu_custom_call.1} parent=51 // pred_fallthru
          _
        %s333 = sand.u32 %s25, 1
        %s334 = scalar_lea.sflag [#allocation3], %s333
        %s335 = sand.u32 %s96, 1
        %s336 = smul.addr %s335, 16
        %s337 = scalar_lea.vmem [#allocation7], %s336
        // Predicated region
        $region61: #{tpu_custom_call.1} parent=51 // pred_check
          %p338 = pneg %p109
        $region62: #{tpu_custom_call.1} parent=51 // pred_check_branch
          %340 = sbr.rel (%p338) target = $region64
        $region63: #{tpu_custom_call.1} parent=51 // pred_region
          %341 = dma.done %s334, 256
        $region64: #{tpu_custom_call.1} parent=51 // pred_fallthru
          _
        // Predicated region
        $region65: #{tpu_custom_call.1} parent=51 // pred_check
          %p342 = pneg %p130
        $region66: #{tpu_custom_call.1} parent=51 // pred_check_branch
          %344 = sbr.rel (%p342) target = $region68
        $region67: #{tpu_custom_call.1} parent=51 // pred_region
          %345 = dma.done [#allocation6], 512
        $region68: #{tpu_custom_call.1} parent=51 // pred_fallthru
          _
        // Predicated region
        $region69: #{tpu_custom_call.1} parent=51 // pred_check
          %p346 = pneg %p172
        $region70: #{tpu_custom_call.1} parent=51 // pred_check_branch
          %348 = sbr.rel (%p346) target = $region72
        $region71: #{tpu_custom_call.1} parent=51 // pred_region
          %349 = dma.done [#allocation10], 512
        $region72: #{tpu_custom_call.1} parent=51 // pred_fallthru
          _
        %p350 = pneg %p41
        %p351 = pneg %p38
        %p352 = pneg %p62
        %p353 = pneg %p59
        %p354 = pneg %p83
        %p355 = pneg %p80
        %s356 = sand.u32 %s25, 1
        %s357 = scalar_lea.sflag [#allocation3], %s356
        %s358 = sand.u32 %s96, 1
        %s359 = smul.addr %s358, 16
        %s360 = scalar_lea.vmem [#allocation7], %s359
        %p361 = pneg %p109
        %p362 = pneg %p106
        %p363 = pneg %p130
        %p364 = pneg %p127
        %p365 = pneg %p151
        %p366 = pneg %p148
        %p367 = pneg %p172
        %p368 = pneg %p169
        %p369 = pneg %p193
        %p370 = pneg %p190
        %p371 = pneg %p219
        %p372 = pneg %p216
        %s373 = sand.u32 %s206, 1
        %s374 = scalar_lea.sflag [#allocation4], %s373
        %s375 = sand.u32 %s206, 1
        %s376 = smul.addr %s375, 8
        %s377 = scalar_lea.vmem [#allocation11], %s376
        %v378 = vld [vmem:[%s337] sm:$0xff]
        %v379 = vld [vmem:[%s337 + $0x8] sm:$0xff]
        %v380 = vld [vmem:[#allocation8] sm:$0xff]
        %v381 = vld [vmem:[#allocation8 + $0x8] sm:$0xff]
        %v382 = vld [vmem:[#allocation8 + $0x10] sm:$0xff]
        %v383 = vld [vmem:[#allocation8 + $0x18] sm:$0xff]
        %v384 = vld [vmem:[%s5] sm:$0x1]
        %v386 = vlaneseq
        %v387 = vshrl.u32 %v386, 7
        %v388 = vsub.s32 0, %v387
        %v389 = vrot.slane %v384, %v388
        %vm391 = vcmask 261120
        %v393 = vsel %vm391, %v378, 0
        %v396 = vsel %vm391, %v379, 0
        %398 = vmatprep.subr.mxu0 0.0
        %399 = vmatpush1.msra.mxu0 %v380
        %400 = vmatprep.subr.mxu0 0.0
        %401 = vmatpush1.msra.mxu0 %v381
        %402 = vmatprep.subr.mxu0 0.0
        %403 = vmatpush1.msra.mxu0 %v382
        %404 = vmatprep.subr.mxu0 0.0
        %405 = vmatpush1.msra.mxu0 %v383
        %406 = vmatprep.subr.mxu0 0.0
        %407 = vmatpush1.msra.mxu0 0.0
        %408 = vmatprep.subr.mxu0 0.0
        %409 = vmatpush1.msra.mxu0 0.0
        %410 = vmatprep.subr.mxu0 0.0
        %411 = vmatpush1.msra.mxu0 0.0
        %412 = vmatprep.subr.mxu0 0.0
        %413 = vmatpush1.msra.mxu0 0.0
        %414 = vmatprep.subr.mxu0 0.0
        %415 = vmatpush1.msra.mxu0 0.0
        %416 = vmatprep.subr.mxu0 0.0
        %417 = vmatpush1.msra.mxu0 0.0
        %418 = vmatprep.subr.mxu0 0.0
        %419 = vmatpush1.msra.mxu0 0.0
        %420 = vmatprep.subr.mxu0 0.0
        %421 = vmatpush1.msra.mxu0 0.0
        %422 = vmatprep.subr.mxu0 0.0
        %423 = vmatpush1.msra.mxu0 0.0
        %424 = vmatprep.subr.mxu0 0.0
        %425 = vmatpush1.msra.mxu0 0.0
        %426 = vmatprep.subr.mxu0 0.0
        %427 = vmatpush1.msra.mxu0 0.0
        %428 = vmatprep.subr.mxu0 0.0
        %429 = vmatpush1.msra.mxu0 0.0
        %430 = vmatprep.subr.mxu0 0.0
        %431 = vmatpush1.msra.mxu0 0.0
        %432 = vmatprep.subr.mxu0 0.0
        %433 = vmatpush1.msra.mxu0 0.0
        %434 = vmatprep.subr.mxu0 0.0
        %435 = vmatpush1.msra.mxu0 0.0
        %436 = vmatprep.subr.mxu0 0.0
        %437 = vmatpush1.msra.mxu0 0.0
        %438 = vmatprep.subr.mxu0 0.0
        %439 = vmatpush1.msra.mxu0 0.0
        %440 = vmatprep.subr.mxu0 0.0
        %441 = vmatpush1.msra.mxu0 0.0
        %442 = vmatprep.subr.mxu0 0.0
        %443 = vmatpush1.msra.mxu0 0.0
        %444 = vmatprep.subr.mxu0 0.0
        %445 = vmatpush1.msra.mxu0 0.0
        %446 = vmatprep.subr.mxu0 0.0
        %447 = vmatpush1.msra.mxu0 0.0
        %448 = vmatprep.subr.mxu0 0.0
        %449 = vmatpush1.msra.mxu0 0.0
        %450 = vmatprep.subr.mxu0 0.0
        %451 = vmatpush1.msra.mxu0 0.0
        %452 = vmatprep.subr.mxu0 0.0
        %453 = vmatpush1.msra.mxu0 0.0
        %454 = vmatprep.subr.mxu0 0.0
        %455 = vmatpush1.msra.mxu0 0.0
        %456 = vmatprep.subr.mxu0 0.0
        %457 = vmatpush1.msra.mxu0 0.0
        %458 = vmatprep.subr.mxu0 0.0
        %459 = vmatpush1.msra.mxu0 0.0
        %460 = vmatprep.subr.mxu0 0.0
        %461 = vmatpush1.msra.mxu0 0.0
        %462 = vmatprep.mubr.f32.mxu0 0.0
        %463 = vmatmul.mubr.f32.gmra.mrb[0].mxu0 %v393
        %v464 = vpop.f32.mrb[0].mxu0
        %v465 = vadd.f32 %v389, %v464
        %v466 = vpop.f32.mrb[0].mxu0
        %467 = vmatprep.mubr.f32.mxu0 0.0
        %468 = vmatmul.mubr.f32.gmra.mrb[0].mxu0 %v396
        %v469 = vpop.f32.mrb[0].mxu0
        %v470 = vadd.f32 %v389, %v469
        %v471 = vpop.f32.mrb[0].mxu0
        %472 = vdwg.mxu0
        %v473 = vld [vmem:[#allocation2] sm:$0xff]
        %v474 = vld [vmem:[#allocation2 + $0x8] sm:$0xff]
        %v475 = vld [vmem:[#allocation2 + $0x10] sm:$0xff]
        %v476 = vld [vmem:[#allocation2 + $0x18] sm:$0xff]
        %v478 = vsel %vm391, %v465, 0
        %v481 = vsel %vm391, %v470, 0
        %483 = vmatprep.subr.mxu0 0.0
        %484 = vmatpush1.msra.mxu0 %v473
        %485 = vmatprep.subr.mxu0 0.0
        %486 = vmatpush1.msra.mxu0 %v474
        %487 = vmatprep.subr.mxu0 0.0
        %488 = vmatpush1.msra.mxu0 %v475
        %489 = vmatprep.subr.mxu0 0.0
        %490 = vmatpush1.msra.mxu0 %v476
        %491 = vmatprep.subr.mxu0 0.0
        %492 = vmatpush1.msra.mxu0 0.0
        %493 = vmatprep.subr.mxu0 0.0
        %494 = vmatpush1.msra.mxu0 0.0
        %495 = vmatprep.subr.mxu0 0.0
        %496 = vmatpush1.msra.mxu0 0.0
        %497 = vmatprep.subr.mxu0 0.0
        %498 = vmatpush1.msra.mxu0 0.0
        %499 = vmatprep.subr.mxu0 0.0
        %500 = vmatpush1.msra.mxu0 0.0
        %501 = vmatprep.subr.mxu0 0.0
        %502 = vmatpush1.msra.mxu0 0.0
        %503 = vmatprep.subr.mxu0 0.0
        %504 = vmatpush1.msra.mxu0 0.0
        %505 = vmatprep.subr.mxu0 0.0
        %506 = vmatpush1.msra.mxu0 0.0
        %507 = vmatprep.subr.mxu0 0.0
        %508 = vmatpush1.msra.mxu0 0.0
        %509 = vmatprep.subr.mxu0 0.0
        %510 = vmatpush1.msra.mxu0 0.0
        %511 = vmatprep.subr.mxu0 0.0
        %512 = vmatpush1.msra.mxu0 0.0
        %513 = vmatprep.subr.mxu0 0.0
        %514 = vmatpush1.msra.mxu0 0.0
        %515 = vmatprep.subr.mxu0 0.0
        %516 = vmatpush1.msra.mxu0 0.0
        %517 = vmatprep.subr.mxu0 0.0
        %518 = vmatpush1.msra.mxu0 0.0
        %519 = vmatprep.subr.mxu0 0.0
        %520 = vmatpush1.msra.mxu0 0.0
        %521 = vmatprep.subr.mxu0 0.0
        %522 = vmatpush1.msra.mxu0 0.0
        %523 = vmatprep.subr.mxu0 0.0
        %524 = vmatpush1.msra.mxu0 0.0
        %525 = vmatprep.subr.mxu0 0.0
        %526 = vmatpush1.msra.mxu0 0.0
        %527 = vmatprep.subr.mxu0 0.0
        %528 = vmatpush1.msra.mxu0 0.0
        %529 = vmatprep.subr.mxu0 0.0
        %530 = vmatpush1.msra.mxu0 0.0
        %531 = vmatprep.subr.mxu0 0.0
        %532 = vmatpush1.msra.mxu0 0.0
        %533 = vmatprep.subr.mxu0 0.0
        %534 = vmatpush1.msra.mxu0 0.0
        %535 = vmatprep.subr.mxu0 0.0
        %536 = vmatpush1.msra.mxu0 0.0
        %537 = vmatprep.subr.mxu0 0.0
        %538 = vmatpush1.msra.mxu0 0.0
        %539 = vmatprep.subr.mxu0 0.0
        %540 = vmatpush1.msra.mxu0 0.0
        %541 = vmatprep.subr.mxu0 0.0
        %542 = vmatpush1.msra.mxu0 0.0
        %543 = vmatprep.subr.mxu0 0.0
        %544 = vmatpush1.msra.mxu0 0.0
        %545 = vmatprep.subr.mxu0 0.0
        %546 = vmatpush1.msra.mxu0 0.0
        %547 = vmatprep.mubr.f32.mxu0 0.0
        %548 = vmatmul.mubr.f32.gmra.mrb[0].mxu0 %v478
        %v549 = vpop.f32.mrb[0].mxu0
        %v550 = vadd.f32 0.0, %v549
        %v551 = vpop.f32.mrb[0].mxu0
        %552 = vmatprep.mubr.f32.mxu0 0.0
        %553 = vmatmul.mubr.f32.gmra.mrb[0].mxu0 %v481
        %v554 = vpop.f32.mrb[0].mxu0
        %v555 = vadd.f32 0.0, %v554
        %v556 = vpop.f32.mrb[0].mxu0
        %557 = vdwg.mxu0
        %v558 = vsel %vm391, %v550, -inf
        %v559 = vsel %vm391, %v555, -inf
        %v560 = vmax.f32 %v558, %v559
        %v561 = vrot.slane %v560, 4
        %v562 = vmax.f32 %v560, %v561
        %v563 = vrot.slane %v562, 2
        %v564 = vmax.f32 %v562, %v563
        %v565 = vrot.slane %v564, 1
        %v566 = vmax.f32 %v564, %v565
        %v567 = vsub.f32 %v550, %v566
        %v568 = vsub.f32 %v555, %v566
        %v569 = vmul.f32 %v567, 1.442695
        %v570 = vpow.pop %v569
        %v571 = vmul.f32 %v568, 1.442695
        %v572 = vpow.pop %v571
        %v573 = vsel %vm391, %v570, 0.0
        %v574 = vsel %vm391, %v572, 0.0
        %v575 = vadd.f32 %v573, %v574
        %v576 = vrot.slane %v575, 4
        %v577 = vadd.f32 %v575, %v576
        %v578 = vrot.slane %v577, 2
        %v579 = vadd.f32 %v577, %v578
        %v580 = vrot.slane %v579, 1
        %v581 = vadd.f32 %v579, %v580
        %v582 = vrcp.pop %v581
        %v583 = vmul.f32 %v570, %v582
        %v584 = vmul.f32 %v572, %v582
        %585 = vxpose.xlu0.b32.start [1/16] %v583, 128
        %586 = vxpose.xlu0.b32.cont [2/16] %v584, 128
        %587 = vxpose.xlu0.b32.cont [3/16] 0.0, 128
        %588 = vxpose.xlu0.b32.cont [4/16] 0.0, 128
        %589 = vxpose.xlu0.b32.cont [5/16] 0.0, 128
        %590 = vxpose.xlu0.b32.cont [6/16] 0.0, 128
        %591 = vxpose.xlu0.b32.cont [7/16] 0.0, 128
        %592 = vxpose.xlu0.b32.cont [8/16] 0.0, 128
        %593 = vxpose.xlu0.b32.cont [9/16] 0.0, 128
        %594 = vxpose.xlu0.b32.cont [10/16] 0.0, 128
        %595 = vxpose.xlu0.b32.cont [11/16] 0.0, 128
        %596 = vxpose.xlu0.b32.cont [12/16] 0.0, 128
        %597 = vxpose.xlu0.b32.cont [13/16] 0.0, 128
        %598 = vxpose.xlu0.b32.cont [14/16] 0.0, 128
        %599 = vxpose.xlu0.b32.cont [15/16] 0.0, 128
        %600 = vxpose.xlu0.b32.end [16/16] 0.0, 128
        %v601 = vpop.trf.xlu0
        %v602 = vpop.trf.xlu0
        %v603 = vpop.trf.xlu0
        %v604 = vpop.trf.xlu0
        %v605 = vpop.trf.xlu0
        %v606 = vpop.trf.xlu0
        %v607 = vpop.trf.xlu0
        %v608 = vpop.trf.xlu0
        %v609 = vpop.trf.xlu0
        %v610 = vpop.trf.xlu0
        %v611 = vpop.trf.xlu0
        %v612 = vpop.trf.xlu0
        %v613 = vpop.trf.xlu0
        %v614 = vpop.trf.xlu0
        %v615 = vpop.trf.xlu0
        %v616 = vpop.trf.xlu0
        %617 = vrot.lane.b32.xlu0 %v465, 96
        %v618 = vpop.permute.xlu0 %617
        %619 = vrot.lane.b32.xlu0 %v470, 96
        %v620 = vpop.permute.xlu0 %619
        %vm623 = vcmask 130048
        %v625 = vsel %vm623, %v601, 0
        %v628 = vsel %vm623, %v602, 0
        %v631 = vsel %vm623, %v603, 0
        %v634 = vsel %vm623, %v604, 0
        %636 = vmatprep.subr.mxu0 0.0
        %637 = vmatpush1.msra.mxu0 %v618
        %638 = vmatprep.subr.mxu0 0.0
        %639 = vmatpush1.msra.mxu0 %v620
        %640 = vmatprep.subr.mxu0 0.0
        %641 = vmatpush1.msra.mxu0 0.0
        %642 = vmatprep.subr.mxu0 0.0
        %643 = vmatpush1.msra.mxu0 0.0
        %644 = vmatprep.subr.mxu0 0.0
        %645 = vmatpush1.msra.mxu0 0.0
        %646 = vmatprep.subr.mxu0 0.0
        %647 = vmatpush1.msra.mxu0 0.0
        %648 = vmatprep.subr.mxu0 0.0
        %649 = vmatpush1.msra.mxu0 0.0
        %650 = vmatprep.subr.mxu0 0.0
        %651 = vmatpush1.msra.mxu0 0.0
        %652 = vmatprep.subr.mxu0 0.0
        %653 = vmatpush1.msra.mxu0 0.0
        %654 = vmatprep.subr.mxu0 0.0
        %655 = vmatpush1.msra.mxu0 0.0
        %656 = vmatprep.subr.mxu0 0.0
        %657 = vmatpush1.msra.mxu0 0.0
        %658 = vmatprep.subr.mxu0 0.0
        %659 = vmatpush1.msra.mxu0 0.0
        %660 = vmatprep.subr.mxu0 0.0
        %661 = vmatpush1.msra.mxu0 0.0
        %662 = vmatprep.subr.mxu0 0.0
        %663 = vmatpush1.msra.mxu0 0.0
        %664 = vmatprep.subr.mxu0 0.0
        %665 = vmatpush1.msra.mxu0 0.0
        %666 = vmatprep.subr.mxu0 0.0
        %667 = vmatpush1.msra.mxu0 0.0
        %668 = vmatprep.subr.mxu0 0.0
        %669 = vmatpush1.msra.mxu0 0.0
        %670 = vmatprep.subr.mxu0 0.0
        %671 = vmatpush1.msra.mxu0 0.0
        %672 = vmatprep.subr.mxu0 0.0
        %673 = vmatpush1.msra.mxu0 0.0
        %674 = vmatprep.subr.mxu0 0.0
        %675 = vmatpush1.msra.mxu0 0.0
        %676 = vmatprep.subr.mxu0 0.0
        %677 = vmatpush1.msra.mxu0 0.0
        %678 = vmatprep.subr.mxu0 0.0
        %679 = vmatpush1.msra.mxu0 0.0
        %680 = vmatprep.subr.mxu0 0.0
        %681 = vmatpush1.msra.mxu0 0.0
        %682 = vmatprep.subr.mxu0 0.0
        %683 = vmatpush1.msra.mxu0 0.0
        %684 = vmatprep.subr.mxu0 0.0
        %685 = vmatpush1.msra.mxu0 0.0
        %686 = vmatprep.subr.mxu0 0.0
        %687 = vmatpush1.msra.mxu0 0.0
        %688 = vmatprep.subr.mxu0 0.0
        %689 = vmatpush1.msra.mxu0 0.0
        %690 = vmatprep.subr.mxu0 0.0
        %691 = vmatpush1.msra.mxu0 0.0
        %692 = vmatprep.subr.mxu0 0.0
        %693 = vmatpush1.msra.mxu0 0.0
        %694 = vmatprep.subr.mxu0 0.0
        %695 = vmatpush1.msra.mxu0 0.0
        %696 = vmatprep.subr.mxu0 0.0
        %697 = vmatpush1.msra.mxu0 0.0
        %698 = vmatprep.subr.mxu0 0.0
        %699 = vmatpush1.msra.mxu0 0.0
        %700 = vmatprep.mubr.f32.mxu0 0.0
        %701 = vmatmul.mubr.f32.gmra.mrb[0].mxu0 %v625
        %v702 = vpop.f32.mrb[0].mxu0
        %v703 = vadd.f32 0.0, %v702
        %v704 = vpop.f32.mrb[0].mxu0
        %705 = vmatprep.mubr.f32.mxu0 0.0
        %706 = vmatmul.mubr.f32.gmra.mrb[0].mxu0 %v628
        %v707 = vpop.f32.mrb[0].mxu0
        %v708 = vadd.f32 0.0, %v707
        %v709 = vpop.f32.mrb[0].mxu0
        %710 = vmatprep.mubr.f32.mxu0 0.0
        %711 = vmatmul.mubr.f32.gmra.mrb[0].mxu0 %v631
        %v712 = vpop.f32.mrb[0].mxu0
        %v713 = vadd.f32 0.0, %v712
        %v714 = vpop.f32.mrb[0].mxu0
        %715 = vmatprep.mubr.f32.mxu0 0.0
        %716 = vmatmul.mubr.f32.gmra.mrb[0].mxu0 %v634
        %v717 = vpop.f32.mrb[0].mxu0
        %v718 = vadd.f32 0.0, %v717
        %v719 = vpop.f32.mrb[0].mxu0
        %720 = vdwg.mxu0
        %v721 = vld [vmem:[%s2] sm:$0x1]
        %v722 = vld [vmem:[%s2 + $0x1] sm:$0x1]
        %v723 = vld [vmem:[%s2 + $0x2] sm:$0x1]
        %v724 = vld [vmem:[%s2 + $0x3] sm:$0x1]
        %v729 = vlaneseq
        %v730 = vshrl.u32 %v729, 7
        %v731 = vsub.s32 0, %v730
        %v732 = vrot.slane %v721, %v731
        %v733 = vlaneseq
        %v734 = vshrl.u32 %v733, 7
        %v735 = vsub.s32 0, %v734
        %v736 = vrot.slane %v722, %v735
        %v737 = vlaneseq
        %v738 = vshrl.u32 %v737, 7
        %v739 = vsub.s32 0, %v738
        %v740 = vrot.slane %v723, %v739
        %v741 = vlaneseq
        %v742 = vshrl.u32 %v741, 7
        %v743 = vsub.s32 0, %v742
        %v744 = vrot.slane %v724, %v743
        %v749 = vmul.f32 %v703, %v732
        %v750 = vmul.f32 %v708, %v736
        %v751 = vmul.f32 %v713, %v740
        %v752 = vmul.f32 %v718, %v744
        %v753 = vsel %vm391, %v749, 0.0
        %v754 = vsel %vm391, %v750, 0.0
        %v755 = vadd.f32 %v753, %v754
        %v756 = vsel %vm391, %v751, 0.0
        %v757 = vadd.f32 %v755, %v756
        %v758 = vsel %vm391, %v752, 0.0
        %v759 = vadd.f32 %v757, %v758
        %v760 = vld [vmem:[#allocation5] sm:$0xff]
        %v761 = vadd.f32 %v759, %v760
        %v762 = vld [vmem:[#allocation9] sm:$0xff]
        %v763 = vld [vmem:[#allocation9 + $0x8] sm:$0xff]
        %v764 = vld [vmem:[#allocation9 + $0x10] sm:$0xff]
        %v765 = vld [vmem:[#allocation9 + $0x18] sm:$0xff]
        %v766 = vld [vmem:[%s7] sm:$0x1]
        %v768 = vlaneseq
        %v769 = vshrl.u32 %v768, 7
        %v770 = vsub.s32 0, %v769
        %v771 = vrot.slane %v766, %v770
        %v774 = vsel %vm391, %v761, 0
        %776 = vmatprep.subr.mxu0 0.0
        %777 = vmatpush1.msra.mxu0 %v762
        %778 = vmatprep.subr.mxu0 0.0
        %779 = vmatpush1.msra.mxu0 %v763
        %780 = vmatprep.subr.mxu0 0.0
        %781 = vmatpush1.msra.mxu0 %v764
        %782 = vmatprep.subr.mxu0 0.0
        %783 = vmatpush1.msra.mxu0 %v765
        %784 = vmatprep.subr.mxu0 0.0
        %785 = vmatpush1.msra.mxu0 0.0
        %786 = vmatprep.subr.mxu0 0.0
        %787 = vmatpush1.msra.mxu0 0.0
        %788 = vmatprep.subr.mxu0 0.0
        %789 = vmatpush1.msra.mxu0 0.0
        %790 = vmatprep.subr.mxu0 0.0
        %791 = vmatpush1.msra.mxu0 0.0
        %792 = vmatprep.subr.mxu0 0.0
        %793 = vmatpush1.msra.mxu0 0.0
        %794 = vmatprep.subr.mxu0 0.0
        %795 = vmatpush1.msra.mxu0 0.0
        %796 = vmatprep.subr.mxu0 0.0
        %797 = vmatpush1.msra.mxu0 0.0
        %798 = vmatprep.subr.mxu0 0.0
        %799 = vmatpush1.msra.mxu0 0.0
        %800 = vmatprep.subr.mxu0 0.0
        %801 = vmatpush1.msra.mxu0 0.0
        %802 = vmatprep.subr.mxu0 0.0
        %803 = vmatpush1.msra.mxu0 0.0
        %804 = vmatprep.subr.mxu0 0.0
        %805 = vmatpush1.msra.mxu0 0.0
        %806 = vmatprep.subr.mxu0 0.0
        %807 = vmatpush1.msra.mxu0 0.0
        %808 = vmatprep.subr.mxu0 0.0
        %809 = vmatpush1.msra.mxu0 0.0
        %810 = vmatprep.subr.mxu0 0.0
        %811 = vmatpush1.msra.mxu0 0.0
        %812 = vmatprep.subr.mxu0 0.0
        %813 = vmatpush1.msra.mxu0 0.0
        %814 = vmatprep.subr.mxu0 0.0
        %815 = vmatpush1.msra.mxu0 0.0
        %816 = vmatprep.subr.mxu0 0.0
        %817 = vmatpush1.msra.mxu0 0.0
        %818 = vmatprep.subr.mxu0 0.0
        %819 = vmatpush1.msra.mxu0 0.0
        %820 = vmatprep.subr.mxu0 0.0
        %821 = vmatpush1.msra.mxu0 0.0
        %822 = vmatprep.subr.mxu0 0.0
        %823 = vmatpush1.msra.mxu0 0.0
        %824 = vmatprep.subr.mxu0 0.0
        %825 = vmatpush1.msra.mxu0 0.0
        %826 = vmatprep.subr.mxu0 0.0
        %827 = vmatpush1.msra.mxu0 0.0
        %828 = vmatprep.subr.mxu0 0.0
        %829 = vmatpush1.msra.mxu0 0.0
        %830 = vmatprep.subr.mxu0 0.0
        %831 = vmatpush1.msra.mxu0 0.0
        %832 = vmatprep.subr.mxu0 0.0
        %833 = vmatpush1.msra.mxu0 0.0
        %834 = vmatprep.subr.mxu0 0.0
        %835 = vmatpush1.msra.mxu0 0.0
        %836 = vmatprep.subr.mxu0 0.0
        %837 = vmatpush1.msra.mxu0 0.0
        %838 = vmatprep.subr.mxu0 0.0
        %839 = vmatpush1.msra.mxu0 0.0
        %840 = vmatprep.mubr.f32.mxu0 0.0
        %841 = vmatmul.mubr.f32.gmra.mrb[0].mxu0 %v774
        %v842 = vpop.f32.mrb[0].mxu0
        %v843 = vadd.f32 %v771, %v842
        %v844 = vpop.f32.mrb[0].mxu0
        %845 = vdwg.mxu0
        %v846 = vmax.f32 %v843, 0.0
        %v847 = vadd.f32 %v761, %v846
        %848 = vst.msk [vmem:[%s377] sm:$0xff] %vm391, %v847
        %s849 = sand.u32 %s206, 1
        %s850 = scalar_lea.sflag [#allocation4], %s849
        %s851 = sand.u32 %s206, 1
        %s852 = smul.addr %s851, 8
        %s853 = scalar_lea.vmem [#allocation11], %s852
        // Predicated region
        $region73: #{tpu_custom_call.1} parent=51 // pred_check
          %p854 = pneg %p216
        $region74: #{tpu_custom_call.1} parent=51 // pred_check_branch
          %856 = sbr.rel (%p854) target = $region76
        $region75: #{tpu_custom_call.1} parent=51 // pred_region
          %s858 = ssub.s32 128, 128
          %859 = vsyncadd %s850, %s858
          %s860 = smul.addr %s25, 128
          %s861 = scalar_lea.hbm %s8, %s860
          %s863 = sshll.u32 %s853, 4
          %s864 = int_to_ptr.vmem [resolvable:$true] %s863
          %866 = dma.vmem_to_hbm [thread:$0]  %s864, 128, %s861, %s850
        $region76: #{tpu_custom_call.1} parent=51 // pred_fallthru
          _
      $region52: #{tpu_custom_call.1} parent=5 // pred_fallthru
        _
      %p867 = scmp.le.s32.totalorder 2, %s20
      // Predicated region
      $region77: #{tpu_custom_call.1} parent=5 // pred_check
        %p868 = pneg %p867
      $region78: #{tpu_custom_call.1} parent=5 // pred_check_branch
        %870 = sbr.rel (%p868) target = $region80
      $region79: #{tpu_custom_call.1} parent=5 // pred_region
        %s871 = ssub.s32 %s20, 2
        // Predicated region
        $region81: #{tpu_custom_call.1} parent=79 // pred_check
          %p872 = pneg %p222
        $region82: #{tpu_custom_call.1} parent=79 // pred_check_branch
          %874 = sbr.rel (%p872) target = $region84
        $region83: #{tpu_custom_call.1} parent=79 // pred_region
          %s875 = sand.u32 %s207, 1
          %s876 = scalar_lea.sflag [#allocation4], %s875
          %s877 = sand.u32 %s207, 1
          %s878 = smul.addr %s877, 8
          %s879 = scalar_lea.vmem [#allocation11], %s878
          %880 = dma.done %s876, 128
        $region84: #{tpu_custom_call.1} parent=79 // pred_fallthru
          _
      $region80: #{tpu_custom_call.1} parent=5 // pred_fallthru
        _
    $region6: #{tpu_custom_call.1} parent=1 // loop_footer
      %s24 = sadd.s32 1, %s20
    $region7: #{tpu_custom_call.1} parent=1 // loop_footer_branch
      %19 = sbr.rel target = $region3
    $region8: #{tpu_custom_call.1} parent=1 // loop_exit
      _
    %881 = vsyncpa [#allocation3], 1
    %s882 = scalar_lea.sflag [#allocation3], 1
    %883 = vsyncpa %s882, 1
    %884 = vsyncpa [#allocation6], 1
    %885 = vsyncpa [#allocation10], 1
    %886 = vsyncpa [#allocation4], 1
    %s887 = scalar_lea.sflag [#allocation4], 1
    %888 = vsyncpa %s887, 1

</llo_original>
